<compile_context>
chip_gen: v6e
topology: v6e:2x2x1
jax: 0.10.0
libtpu: 0.0.40
codegen_flags: <defaults>
</compile_context>

<pallas_src>
import functools

import jax
import jax.numpy as jnp
from jax import lax
from jax.experimental import pallas as pl
from jax.experimental.pallas import tpu as pltpu


def _round_up(a, b):
    return (a + b - 1) // b * b


def _fused_cnn_kernel(pT_ref, w_ref, bias_ref, o_ref, *, c_out):
    # Rows [0, c_out)       = conv branch  (BN + bias + 1/L_out folded into W/bias)
    # Rows [c_out, 2*c_out) = avgpool -> 1x1 conv -> BN branch (all folded)
    # Grid axis 1 (t, "arbitrary") is the conv-time axis: accumulate into the resident
    # output block; since 1/L_out is pre-folded, the sum over t IS the time-mean.
    t = pl.program_id(1)

    @pl.when(t == 0)
    def _():
        o_ref[...] = jnp.zeros_like(o_ref)

    acc = jnp.dot(w_ref[...], pT_ref[...], preferred_element_type=jnp.float32)
    acc = acc + bias_ref[...]                       # (2*c_out, 1) broadcast over lanes
    main = jnp.maximum(acc[:c_out, :], 0.0)         # ReLU on the conv branch
    # TODO(synk): nn.Dropout is identity in eval mode; training-mode RNG masking not emulated.
    ident = acc[c_out:, :]
    o_ref[...] += jnp.maximum(main + ident, 0.0)    # residual add + final ReLU, sum over t


def _fused_cnn(pT3, w_merged, bias_merged, c_out, *, tm):
    """pT3: (L_out, K*C, NW_pad) t-major transposed im2col patches.
    Returns (C_out, NW_pad) float32 time-mean features (mean folded into W/bias)."""
    L_out, KC, NWp = pT3.shape
    n_out = w_merged.shape[0]                       # 2 * c_out
    itemsize = jnp.dtype(pT3.dtype).itemsize
    cost = pl.CostEstimate(
        flops=2 * L_out * NWp * KC * n_out,
        transcendentals=0,
        bytes_accessed=(L_out * KC * NWp + n_out * KC) * itemsize
                       + n_out * 4 + c_out * NWp * 4,
    )
    return pl.pallas_call(
        functools.partial(_fused_cnn_kernel, c_out=c_out),
        out_shape=jax.ShapeDtypeStruct((c_out, NWp), jnp.float32),
        grid=(NWp // tm, L_out),                                     # reduction axis last
        in_specs=[
            pl.BlockSpec((None, KC, tm), lambda i, t: (t, 0, i)),    # patches^T, lane tiles
            pl.BlockSpec((n_out, KC), lambda i, t: (0, 0)),          # merged weights (resident)
            pl.BlockSpec((n_out, 1), lambda i, t: (0, 0)),           # merged bias    (resident)
        ],
        out_specs=pl.BlockSpec((c_out, tm), lambda i, t: (0, i)),    # lane-dense, resident over t
        compiler_params=pltpu.CompilerParams(
            dimension_semantics=("parallel", "arbitrary")),
        cost_estimate=cost,
    )(pT3, w_merged, bias_merged)


def cnn_local_feature_extractor(x, params, *, window_size=5, stride=1,
                                kernel_size=2, conv_stride=2,
                                compute_dtype=jnp.float32, tm=512):
    """x: (N, C*J, T) float32.  Returns (N, num_windows + 4, C_out) float32."""
    N, CJ, T = x.shape
    K = kernel_size
    # The residual add inside CNNFeatureExtractor only matches shapes when conv stride == K.
    assert conv_stride == K, "residual add requires conv stride == kernel size"

    # 1) pad very short sequences to length 5 by repeating the last frame (as in the module)
    if T < 5:
        x = jnp.concatenate([x, jnp.repeat(x[:, :, -1:], 5 - T, axis=2)], axis=2)
        T = 5

    # 2) unfold: windows[n, c, w, j] = x[n, c, w*stride + j]
    W = (T - window_size) // stride + 1
    idx = jnp.arange(W)[:, None] * stride + jnp.arange(window_size)[None, :]
    windows = x[:, :, idx]                                   # (N, CJ, W, window_size)
    # The module does `.contiguous().view(N*num_windows, CJ, window_size)` WITHOUT a
    # permute, i.e. a raw row-major reshape; replicate that exactly.
    NW = N * W
    xw = windows.reshape(NW, CJ, window_size)

    # 3) t-major transposed im2col: pT3[t, k*CJ + c, m] = xw[m, c, t*K + k]
    L_out = (window_size - K) // conv_stride + 1             # == window_size // K
    patches = xw[:, :, :L_out * K].reshape(NW, CJ, L_out, K)         # (m, c, t, k)
    pT3 = patches.transpose(2, 3, 1, 0).reshape(L_out, K * CJ, NW)   # (t, k*CJ+c, m)
    tm_eff = min(_round_up(tm, 128), _round_up(NW, 128))             # lane tile, mult of 128
    NW_pad = _round_up(NW, tm_eff)
    if NW_pad != NW:
        pT3 = jnp.pad(pT3, ((0, 0), (0, 0), (0, NW_pad - NW)))       # zero-padded last tile
    pT3 = pT3.astype(compute_dtype)

    # 4) fold BN(eval) + conv bias + avg-pool + 1/L_out time-mean into merged weight / bias
    C_out = params["w1"].shape[0]
    eps = 1e-5
    inv_l = 1.0 / L_out
    s1 = params["gamma1"] / jnp.sqrt(params["var1"] + eps)
    s2 = params["gamma2"] / jnp.sqrt(params["var2"] + eps)
    w_main = params["w1"].transpose(0, 2, 1).reshape(C_out, K * CJ) * (s1[:, None] * inv_l)
    w_down = jnp.tile(params["wd"] * (s2[:, None] * inv_l / K), (1, K))   # pool folded into W
    w_merged = jnp.concatenate([w_main, w_down], axis=0).astype(compute_dtype)
    b_main = ((params["b1"] - params["mean1"]) * s1 + params["beta1"]) * inv_l
    b_down = (params["beta2"] - params["mean2"] * s2) * inv_l
    bias_merged = jnp.concatenate([b_main, b_down]).reshape(2 * C_out, 1).astype(jnp.float32)

    # 5) fused CNN + time-mean over all N*W windows at once
    outT = _fused_cnn(pT3, w_merged, bias_merged, C_out, tm=tm_eff)   # (C_out, NW_pad)

    # 6) view back to (N, W, C_out), append 4 copies of the last window
    feats = outT[:, :NW].T.reshape(N, W, C_out)
    last = feats[:, -1:, :]
    return jnp.concatenate([feats, jnp.tile(last, (1, 4, 1))], axis=1)


def _reference(x, params, window_size, stride, kernel_size, conv_stride):
    """Pure-JAX mirror of the PyTorch CNNLocalFeatureExtractor forward (eval mode)."""
    eps = 1e-5
    N, CJ, T = x.shape
    if T < 5:
        x = jnp.concatenate([x, jnp.repeat(x[:, :, -1:], 5 - T, axis=2)], axis=2)
        T = 5
    W = (T - window_size) // stride + 1
    idx = jnp.arange(W)[:, None] * stride + jnp.arange(window_size)[None, :]
    xw = x[:, :, idx].reshape(N * W, CJ, window_size)        # raw view, as in the module

    bc = lambda v: v[None, :, None]
    out = lax.conv_general_dilated(xw, params["w1"], (conv_stride,), "VALID",
                                   dimension_numbers=("NCH", "OIH", "NCH"))
    out = out + bc(params["b1"])
    out = (out - bc(params["mean1"])) / jnp.sqrt(bc(params["var1"]) + eps) \
        * bc(params["gamma1"]) + bc(params["beta1"])
    out = jnp.maximum(out, 0.0)                              # dropout = identity in eval
    K = kernel_size
    Lp = window_size // K
    pooled = xw[:, :, :Lp * K].reshape(N * W, CJ, Lp, K).mean(-1)
    ident = jnp.einsum("oc,ncl->nol", params["wd"], pooled)
    ident = (ident - bc(params["mean2"])) / jnp.sqrt(bc(params["var2"]) + eps) \
        * bc(params["gamma2"]) + bc(params["beta2"])
    feats = jnp.maximum(out + ident, 0.0)                    # (N*W, C_out, L_out)
    feats = feats.mean(axis=2).reshape(N, W, -1)
    last = feats[:, -1:, :]
    return jnp.concatenate([feats, jnp.tile(last, (1, 4, 1))], axis=1)


if __name__ == "__main__":
    # Inner CNN config: in_channels=4 (forward sees 4+24=28 channels), out_channels=32,
    # kernel_size=2, stride=2.  Local extractor: window_size=5, stride=1.
    in_channels, out_channels, kernel_size, conv_stride = 4, 32, 2, 2
    window_size, win_stride = 5, 1
    CJ = in_channels + 24
    N, T = 2, 16

    key = jax.random.PRNGKey(0)
    ks = jax.random.split(key, 11)
    params = {
        "w1": 0.1 * jax.random.normal(ks[0], (out_channels, CJ, kernel_size), jnp.float32),
        "b1": 0.1 * jax.random.normal(ks[1], (out_channels,), jnp.float32),
        "wd": 0.1 * jax.random.normal(ks[2], (out_channels, CJ), jnp.float32),
        "gamma1": 1.0 + 0.1 * jax.random.normal(ks[3], (out_channels,), jnp.float32),
        "beta1": 0.1 * jax.random.normal(ks[4], (out_channels,), jnp.float32),
        "mean1": 0.1 * jax.random.normal(ks[5], (out_channels,), jnp.float32),
        "var1": 0.5 + jax.random.uniform(ks[6], (out_channels,), jnp.float32),
        "gamma2": 1.0 + 0.1 * jax.random.normal(ks[7], (out_channels,), jnp.float32),
        "beta2": 0.1 * jax.random.normal(ks[8], (out_channels,), jnp.float32),
        "mean2": jnp.zeros((out_channels,), jnp.float32),
        "var2": jnp.ones((out_channels,), jnp.float32),
    }
    x = jax.random.normal(ks[9], (N, CJ, T), jnp.float32)

    cfg = dict(window_size=window_size, stride=win_stride,
               kernel_size=kernel_size, conv_stride=conv_stride)
    num_windows = (T - window_size) // win_stride + 1

    # f32 path
    out = jax.block_until_ready(cnn_local_feature_extractor(x, params, **cfg))
    ref = _reference(x, params, window_size, win_stride, kernel_size, conv_stride)
    assert out.shape == (N, num_windows + 4, out_channels), out.shape
    assert jnp.allclose(out, ref, rtol=1e-3, atol=1e-4), float(jnp.max(jnp.abs(out - ref)))

    # bf16 matmul operands (f32 accumulation / epilogue) - the v6e/v7x fast path
    out_bf16 = jax.block_until_ready(
        cnn_local_feature_extractor(x, params, compute_dtype=jnp.bfloat16, **cfg))
    assert jnp.allclose(out_bf16, ref, rtol=5e-2, atol=8e-2), \
        float(jnp.max(jnp.abs(out_bf16 - ref)))

    # very short sequence: exercises the T < 5 repeat-last-frame padding branch
    x_short = jax.random.normal(ks[10], (N, CJ, 3), jnp.float32)
    out_s = jax.block_until_ready(cnn_local_feature_extractor(x_short, params, **cfg))
    ref_s = _reference(x_short, params, window_size, win_stride, kernel_size, conv_stride)
    assert out_s.shape == (N, 1 + 4, out_channels), out_s.shape
    assert jnp.allclose(out_s, ref_s, rtol=1e-3, atol=1e-4), \
        float(jnp.max(jnp.abs(out_s - ref_s)))

    print("KERNEL_OK")
</pallas_src>

<mosaic_0001>
module attributes {stable_mosaic.version = 11 : i64} {
  func.func @_fused_cnn_kernel(%arg0: i32, %arg1: i32, %arg2: memref<1x56x128xf32, #tpu.memory_space<vmem>>, %arg3: memref<64x56xf32, #tpu.memory_space<vmem>>, %arg4: memref<64x1xf32, #tpu.memory_space<vmem>>, %arg5: memref<32x128xf32, #tpu.memory_space<vmem>>) attributes {dimension_semantics = [#tpu.dimension_semantics<parallel>, #tpu.dimension_semantics<arbitrary>], iteration_bounds = array<i64: 1, 2>, scalar_prefetch = 0 : i64, scratch_operands = 0 : i64, tpu.core_type = #tpu.core_type<tc>, window_params = [{transform_indices = @transform_0, window_bounds = array<i64: 1, 56, 128>}, {pipeline_mode = #tpu.pipeline_mode<synchronous>, transform_indices = @transform_1, window_bounds = array<i64: 64, 56>}, {pipeline_mode = #tpu.pipeline_mode<synchronous>, transform_indices = @transform_2, window_bounds = array<i64: 64, 1>}, {transform_indices = @transform_3, window_bounds = array<i64: 32, 128>}]} {
    %c0_i32 = arith.constant 0 : i32
    %0 = arith.cmpi eq, %arg1, %c0_i32 : i32
    %1 = arith.extui %0 : i1 to i32
    %c0_i32_0 = arith.constant 0 : i32
    %2 = arith.cmpi ne, %1, %c0_i32_0 : i32
    scf.if %2 {
      %cst_13 = arith.constant 0.000000e+00 : f32
      %20 = vector.broadcast %cst_13 : f32 to vector<32x128xf32>
      %c0_14 = arith.constant 0 : index
      %c0_15 = arith.constant 0 : index
      %21 = vector.load %arg5[%c0_14, %c0_15] : memref<32x128xf32, #tpu.memory_space<vmem>>, vector<32x128xf32>
      tpu.vector_store %arg5[%c0_14, %c0_15], %20 {strides = array<i32>} : memref<32x128xf32, #tpu.memory_space<vmem>>, vector<32x128xf32>,
    } else {
    }
    %c0 = arith.constant 0 : index
    %c0_1 = arith.constant 0 : index
    %3 = vector.load %arg3[%c0, %c0_1] : memref<64x56xf32, #tpu.memory_space<vmem>>, vector<64x56xf32>
    %c0_2 = arith.constant 0 : index
    %c0_3 = arith.constant 0 : index
    %c0_4 = arith.constant 0 : index
    %4 = vector.load %arg2[%c0_2, %c0_3, %c0_4] : memref<1x56x128xf32, #tpu.memory_space<vmem>>, vector<1x56x128xf32>
    %5 = vector.shape_cast %4 : vector<1x56x128xf32> to vector<56x128xf32>
    %cst = arith.constant dense<0.000000e+00> : vector<64x128xf32>
    %6 = tpu.matmul %3, %5, %cst {dimension_numbers = #tpu.dot_dimension_numbers<[1], [0], [0], [1], [0, 0, 1, 1], [], []>} : vector<64x56xf32>, vector<56x128xf32>, vector<64x128xf32> -> vector<64x128xf32>
    %c0_5 = arith.constant 0 : index
    %c0_6 = arith.constant 0 : index
    %7 = vector.load %arg4[%c0_5, %c0_6] : memref<64x1xf32, #tpu.memory_space<vmem>>, vector<64x1xf32>
    %8 = vector.broadcast %7 : vector<64x1xf32> to vector<64x128xf32>
    %9 = arith.addf %6, %8 : vector<64x128xf32>
    %10 = vector.extract_strided_slice %9 {offsets = [0, 0], sizes = [32, 128], strides = [1, 1]} : vector<64x128xf32> to vector<32x128xf32>
    %cst_7 = arith.constant 0.000000e+00 : f32
    %11 = vector.broadcast %cst_7 : f32 to vector<32x128xf32>
    %12 = arith.maximumf %10, %11 : vector<32x128xf32>
    %13 = vector.extract_strided_slice %9 {offsets = [32, 0], sizes = [32, 128], strides = [1, 1]} : vector<64x128xf32> to vector<32x128xf32>
    %c0_8 = arith.constant 0 : index
    %c0_9 = arith.constant 0 : index
    %14 = vector.load %arg5[%c0_8, %c0_9] : memref<32x128xf32, #tpu.memory_space<vmem>>, vector<32x128xf32>
    %15 = arith.addf %12, %13 : vector<32x128xf32>
    %cst_10 = arith.constant 0.000000e+00 : f32
    %16 = vector.broadcast %cst_10 : f32 to vector<32x128xf32>
    %17 = arith.maximumf %15, %16 : vector<32x128xf32>
    %18 = arith.addf %14, %17 : vector<32x128xf32>
    %c0_11 = arith.constant 0 : index
    %c0_12 = arith.constant 0 : index
    %19 = vector.load %arg5[%c0_11, %c0_12] : memref<32x128xf32, #tpu.memory_space<vmem>>, vector<32x128xf32>
    tpu.vector_store %arg5[%c0_11, %c0_12], %18 {strides = array<i32>} : memref<32x128xf32, #tpu.memory_space<vmem>>, vector<32x128xf32>,
    return
  }
  func.func @transform_0(%arg0: i32, %arg1: i32) -> (i32, i32, i32) {
    %c0_i32 = arith.constant 0 : i32
    %c0_i32_0 = arith.constant 0 : i32
    return %arg1, %c0_i32, %arg0 : i32, i32, i32
  }
  func.func @transform_1(%arg0: i32, %arg1: i32) -> (i32, i32) {
    %c0_i32 = arith.constant 0 : i32
    %c0_i32_0 = arith.constant 0 : i32
    %c0_i32_1 = arith.constant 0 : i32
    return %c0_i32, %c0_i32_0 : i32, i32
  }
  func.func @transform_2(%arg0: i32, %arg1: i32) -> (i32, i32) {
    %c0_i32 = arith.constant 0 : i32
    %c0_i32_0 = arith.constant 0 : i32
    %c0_i32_1 = arith.constant 0 : i32
    return %c0_i32, %c0_i32_0 : i32, i32
  }
  func.func @transform_3(%arg0: i32, %arg1: i32) -> (i32, i32) {
    %c0_i32 = arith.constant 0 : i32
    %c0_i32_0 = arith.constant 0 : i32
    return %c0_i32, %arg0 : i32, i32
  }
}

</mosaic_0001>

<llo_original>
// kernel: tpu_custom_call.1
$region0: #{tpu_custom_call.1}
  #allocation0 [shape = 'u32[]', space=smem, size = 0x4, offset = 0x4, fixed_abs, tag = 'smem constant byte address 0x4 - core index']
  #allocation1 [shape = 'u32[144,128]{1,0:T(1,128)}', space=vmem, size = 0x12000, scoped, tag = 'internal scratch']
  %s0 = inlined_call_operand.vmem [shape: f32[2,56,128], index: 0, kind: input, shape index: {}]
  %s1 = inlined_call_operand.vmem [shape: f32[64,56], index: 1, kind: input, shape index: {}]
  %s2 = inlined_call_operand.vmem [shape: f32[64,1], index: 2, kind: input, shape index: {}]
  %s3 = inlined_call_operand.hbm [shape: f32[32,128], index: 3, kind: output, shape index: {}]
  %s4 = sld [smem:[#allocation0]]
  $region49: #{tpu_custom_call.1} parent=0
    _
  %s6 = ssub.s32 1, %s4
  %s7 = scalar_select 0, %s6, %s4
  $region1: #{tpu_custom_call.1} parent=0
    #allocation2 [shape = 'u8[16384]{0}', space=vmem, size = 0x4000, scoped, tag = 'output window, operand 0, single buffered']
    #allocation3 [shape = 's32[2]{0}', space=sflag, size = 0x8, scoped, tag = 'scoped memory for tpu_custom_call.1']
    %8 = vsyncpa [#allocation3], 0
    loop: start=0, step=1, limit=4
    $region2: #{tpu_custom_call.1} parent=1 // loop_pre_header
      _
    $region3: #{tpu_custom_call.1} parent=1 // loop_header
      %s10 = sphi 0, %s14
      %p11 = scmp.ge.s32.totalorder %s10, 4
      %s17 = sphi 0, %s29
      %s18 = sphi 0, %s25
      %s19 = sphi 0, %s17
      %s20 = sphi 0, %s18
      %s21 = sphi 0, %s19
      %s22 = sphi 0, %s20
      %s34 = sphi 0, %s36
      %s37 = sphi 0, %s34
      %s38 = sphi 0, %s37
      %s54 = sphi 0, %s38
      %s58 = sphi 0, %s58
      %s60 = sphi 0, %s58
      %s61 = sphi 0, %s60
      %s75 = sphi 0, %s61
      %s79 = sphi 0, %s79
      %s81 = sphi 0, %s79
      %s82 = sphi 0, %s81
      %s96 = sphi 0, %s82
      %s102 = sphi 0, %s104
      %s105 = sphi 0, %s102
      %s106 = sphi 0, %s105
      %s122 = sphi 0, %s106
    $region4: #{tpu_custom_call.1} parent=1 // loop_header_branch
      %13 = sbr.rel (%p11) target = $region8
    $region5: #{tpu_custom_call.1} parent=1 // loop_body
      %s15 = ssub.s32 %s10, 1
      %s16 = ssub.s32 %s10, 2
      %s23 = sadd.s32 1, %s18
      %p24 = scmp.ge.s32.totalorder %s23, 2
      %s25 = scalar_select %p24, 0, %s23
      %s26 = sadd.s32 1, %s17
      %s27 = scalar_select %p24, %s26, %s17
      %p28 = scmp.ge.s32.totalorder %s27, 1
      %s29 = scalar_select %p28, 0, %s27
      %s30 = ssub.s32 %s18, %s25
      %s31 = ssub.s32 %s17, %s29
      %s32 = sor.u32 %s30, %s31
      %p33 = scmp.eq.s32.totalorder %s32, 0
      %s35 = sadd.s32 %s34, 1
      %s36 = scalar_select %p33, %s34, %s35
      %p39 = pneg %p33
      %p40 = scmp.eq.s32.totalorder %s10, 1
      %p41 = por %p39, %p40
      %p42 = scmp.ne.s32.totalorder %s34, %s37
      %p43 = scmp.eq.s32.totalorder %s10, 0
      %p44 = por %p42, %p43
      %p45 = scmp.ne.s32.totalorder %s34, %s37
      %p46 = scmp.eq.s32.totalorder %s15, 1
      %p47 = por %p45, %p46
      %p48 = scmp.ne.s32.totalorder %s37, %s38
      %p49 = scmp.eq.s32.totalorder %s15, 0
      %p50 = por %p48, %p49
      %p51 = scmp.ne.s32.totalorder %s37, %s38
      %p52 = scmp.eq.s32.totalorder %s16, 1
      %p53 = por %p51, %p52
      %p55 = scmp.ne.s32.totalorder %s38, %s54
      %p56 = scmp.eq.s32.totalorder %s16, 0
      %p57 = por %p55, %p56
      %s59 = sadd.s32 %s58, 1
      %p62 = scmp.eq.s32.totalorder %s10, 1
      %p63 = scmp.ne.s32.totalorder %s58, %s60
      %p64 = scmp.eq.s32.totalorder %s10, 0
      %p65 = por %p63, %p64
      %p66 = scmp.ne.s32.totalorder %s58, %s60
      %p67 = scmp.eq.s32.totalorder %s15, 1
      %p68 = por %p66, %p67
      %p69 = scmp.ne.s32.totalorder %s60, %s61
      %p70 = scmp.eq.s32.totalorder %s15, 0
      %p71 = por %p69, %p70
      %p72 = scmp.ne.s32.totalorder %s60, %s61
      %p73 = scmp.eq.s32.totalorder %s16, 1
      %p74 = por %p72, %p73
      %p76 = scmp.ne.s32.totalorder %s61, %s75
      %p77 = scmp.eq.s32.totalorder %s16, 0
      %p78 = por %p76, %p77
      %s80 = sadd.s32 %s79, 1
      %p83 = scmp.eq.s32.totalorder %s10, 1
      %p84 = scmp.ne.s32.totalorder %s79, %s81
      %p85 = scmp.eq.s32.totalorder %s10, 0
      %p86 = por %p84, %p85
      %p87 = scmp.ne.s32.totalorder %s79, %s81
      %p88 = scmp.eq.s32.totalorder %s15, 1
      %p89 = por %p87, %p88
      %p90 = scmp.ne.s32.totalorder %s81, %s82
      %p91 = scmp.eq.s32.totalorder %s15, 0
      %p92 = por %p90, %p91
      %p93 = scmp.ne.s32.totalorder %s81, %s82
      %p94 = scmp.eq.s32.totalorder %s16, 1
      %p95 = por %p93, %p94
      %p97 = scmp.ne.s32.totalorder %s82, %s96
      %p98 = scmp.eq.s32.totalorder %s16, 0
      %p99 = por %p97, %p98
      %s100 = ssub.s32 %s17, %s29
      %p101 = scmp.eq.s32.totalorder %s100, 0
      %s103 = sadd.s32 %s102, 1
      %s104 = scalar_select %p101, %s102, %s103
      %p107 = pneg %p101
      %p108 = scmp.eq.s32.totalorder %s10, 1
      %p109 = por %p107, %p108
      %p110 = scmp.ne.s32.totalorder %s102, %s105
      %p111 = scmp.eq.s32.totalorder %s10, 0
      %p112 = por %p110, %p111
      %p113 = scmp.ne.s32.totalorder %s102, %s105
      %p114 = scmp.eq.s32.totalorder %s15, 1
      %p115 = por %p113, %p114
      %p116 = scmp.ne.s32.totalorder %s105, %s106
      %p117 = scmp.eq.s32.totalorder %s15, 0
      %p118 = por %p116, %p117
      %p119 = scmp.ne.s32.totalorder %s105, %s106
      %p120 = scmp.eq.s32.totalorder %s16, 1
      %p121 = por %p119, %p120
      %p123 = scmp.ne.s32.totalorder %s106, %s122
      %p124 = scmp.eq.s32.totalorder %s16, 0
      %p125 = por %p123, %p124
      %p126 = scmp.le.s32.totalorder 1, %s10
      %p127 = scmp.lt.s32.totalorder %s10, 3
      %p128 = pnand %p126, %p127
      %p129 = pneg %p128
      // Predicated region
      $region9: #{tpu_custom_call.1} parent=5 // pred_check
        _
      $region10: #{tpu_custom_call.1} parent=5 // pred_check_branch
        %131 = sbr.rel (%p128) target = $region12
      $region11: #{tpu_custom_call.1} parent=5 // pred_region
        %s132 = ssub.s32 %s10, 1
        // Predicated region
        $region13: #{tpu_custom_call.1} parent=11 // pred_check
          %p133 = pneg %p71
        $region14: #{tpu_custom_call.1} parent=11 // pred_check_branch
          %135 = sbr.rel (%p133) target = $region16
        $region15: #{tpu_custom_call.1} parent=11 // pred_region
          _
        $region16: #{tpu_custom_call.1} parent=11 // pred_fallthru
          _
        // Predicated region
        $region17: #{tpu_custom_call.1} parent=11 // pred_check
          %p136 = pneg %p92
        $region18: #{tpu_custom_call.1} parent=11 // pred_check_branch
          %138 = sbr.rel (%p136) target = $region20
        $region19: #{tpu_custom_call.1} parent=11 // pred_region
          _
        $region20: #{tpu_custom_call.1} parent=11 // pred_fallthru
          _
      $region12: #{tpu_custom_call.1} parent=5 // pred_fallthru
        _
      %p139 = scmp.lt.s32.totalorder %s10, 2
      // Predicated region
      $region21: #{tpu_custom_call.1} parent=5 // pred_check
        %p140 = pneg %p139
      $region22: #{tpu_custom_call.1} parent=5 // pred_check_branch
        %142 = sbr.rel (%p140) target = $region24
      $region23: #{tpu_custom_call.1} parent=5 // pred_region
        // Predicated region
        $region25: #{tpu_custom_call.1} parent=23 // pred_check
          %p143 = pneg %p44
        $region26: #{tpu_custom_call.1} parent=23 // pred_check_branch
          %145 = sbr.rel (%p143) target = $region28
        $region27: #{tpu_custom_call.1} parent=23 // pred_region
          %p146 = scmp.lt.s32.totalorder %s18, 1
          %s147 = scalar_select %p146, %s18, 1
          %p148 = scmp.lt.s32.totalorder %s17, 0
          %s149 = scalar_select %p148, %s17, 0
          %s150 = smul.addr %s147, 7
          %s151 = sadd.s32 %s149, %s150
          %s152 = smul.addr %s151, 8
          %s153 = scalar_lea.vmem %s0, %s152
        $region28: #{tpu_custom_call.1} parent=23 // pred_fallthru
          _
      $region24: #{tpu_custom_call.1} parent=5 // pred_fallthru
        _
      %p154 = scmp.le.s32.totalorder 1, %s10
      %p155 = scmp.lt.s32.totalorder %s10, 3
      %p156 = pnand %p154, %p155
      %p157 = pneg %p156
      // Predicated region
      $region29: #{tpu_custom_call.1} parent=5 // pred_check
        _
      $region30: #{tpu_custom_call.1} parent=5 // pred_check_branch
        %159 = sbr.rel (%p156) target = $region32
      $region31: #{tpu_custom_call.1} parent=5 // pred_region
        %s160 = ssub.s32 %s10, 1
        %p161 = scmp.lt.s32.totalorder %s20, 1
        %s162 = scalar_select %p161, %s20, 1
        %p163 = scmp.lt.s32.totalorder %s19, 0
        %s164 = scalar_select %p163, %s19, 0
        %s165 = smul.addr %s162, 7
        %s166 = sadd.s32 %s164, %s165
        %s167 = smul.addr %s166, 8
        %s168 = scalar_lea.vmem %s0, %s167
        %p169 = pneg %p50
        %p170 = pneg %p47
        %p171 = pneg %p71
        %p172 = pneg %p68
        %p173 = pneg %p92
        %p174 = pneg %p89
        %p175 = pneg %p118
        %p176 = pneg %p115
        %p177 = scmp.lt.s32.totalorder %s20, 1
        %s178 = scalar_select %p177, %s20, 1
        %p179 = scmp.lt.s32.totalorder %s19, 0
        %s180 = scalar_select %p179, %s19, 0
        %s181 = smul.addr %s178, 7
        %s182 = sadd.s32 %s180, %s181
        %s183 = smul.addr %s182, 8
        %s184 = scalar_lea.vmem %s0, %s183
        %p185 = scmp.eq.s32.totalorder %s20, 0
        // Predicated region
        $region33: #{tpu_custom_call.1} parent=31 // pred_check
          %p186 = pneg %p185
        $region34: #{tpu_custom_call.1} parent=31 // pred_check_branch
          %188 = sbr.rel (%p186) target = $region36
        $region35: #{tpu_custom_call.1} parent=31 // pred_region
          %189 = vst [vmem:[#allocation2] sm:$0xff] 0.0
          %190 = vst [vmem:[#allocation2 + $0x8] sm:$0xff] 0.0
          %191 = vst [vmem:[#allocation2 + $0x10] sm:$0xff] 0.0
          %192 = vst [vmem:[#allocation2 + $0x18] sm:$0xff] 0.0
        $region36: #{tpu_custom_call.1} parent=31 // pred_fallthru
          _
        %v193 = vld [vmem:[%s1] sm:$0xff]
        %v194 = vld [vmem:[%s1 + $0x8] sm:$0xff]
        %v195 = vld [vmem:[%s1 + $0x10] sm:$0xff]
        %v196 = vld [vmem:[%s1 + $0x18] sm:$0xff]
        %v197 = vld [vmem:[%s1 + $0x20] sm:$0xff]
        %v198 = vld [vmem:[%s1 + $0x28] sm:$0xff]
        %v199 = vld [vmem:[%s1 + $0x30] sm:$0xff]
        %v200 = vld [vmem:[%s1 + $0x38] sm:$0xff]
        %v201 = vld [vmem:[%s184] sm:$0xff]
        %v202 = vld [vmem:[%s184 + $0x8] sm:$0xff]
        %v203 = vld [vmem:[%s184 + $0x10] sm:$0xff]
        %v204 = vld [vmem:[%s184 + $0x18] sm:$0xff]
        %v205 = vld [vmem:[%s184 + $0x20] sm:$0xff]
        %v206 = vld [vmem:[%s184 + $0x28] sm:$0xff]
        %v207 = vld [vmem:[%s184 + $0x30] sm:$0xff]
        %v208 = vld [vmem:[%s2] sm:$0xff]
        %v209 = vld [vmem:[%s2 + $0x8] sm:$0xff]
        %v210 = vld [vmem:[%s2 + $0x10] sm:$0xff]
        %v211 = vld [vmem:[%s2 + $0x18] sm:$0xff]
        %v212 = vld [vmem:[%s2 + $0x20] sm:$0xff]
        %v213 = vld [vmem:[%s2 + $0x28] sm:$0xff]
        %v214 = vld [vmem:[%s2 + $0x30] sm:$0xff]
        %v215 = vld [vmem:[%s2 + $0x38] sm:$0xff]
        %217 = vset.pattern.permute.xlu0 0
        %218 = vperm.xlu0 %217, %v208
        %v219 = vpop.permute.xlu0 %218
        %222 = vset.pattern.permute.xlu0 0
        %223 = vperm.xlu0 %222, %v209
        %v224 = vpop.permute.xlu0 %223
        %227 = vset.pattern.permute.xlu0 0
        %228 = vperm.xlu0 %227, %v210
        %v229 = vpop.permute.xlu0 %228
        %232 = vset.pattern.permute.xlu0 0
        %233 = vperm.xlu0 %232, %v211
        %v234 = vpop.permute.xlu0 %233
        %237 = vset.pattern.permute.xlu0 0
        %238 = vperm.xlu0 %237, %v212
        %v239 = vpop.permute.xlu0 %238
        %242 = vset.pattern.permute.xlu0 0
        %243 = vperm.xlu0 %242, %v213
        %v244 = vpop.permute.xlu0 %243
        %247 = vset.pattern.permute.xlu0 0
        %248 = vperm.xlu0 %247, %v214
        %v249 = vpop.permute.xlu0 %248
        %252 = vset.pattern.permute.xlu0 0
        %253 = vperm.xlu0 %252, %v215
        %v254 = vpop.permute.xlu0 %253
        %vm256 = vcmask 457728
        %v258 = vsel %vm256, %v193, 0
        %v261 = vsel %vm256, %v194, 0
        %v264 = vsel %vm256, %v195, 0
        %v267 = vsel %vm256, %v196, 0
        %v270 = vsel %vm256, %v197, 0
        %v273 = vsel %vm256, %v198, 0
        %v276 = vsel %vm256, %v199, 0
        %v279 = vsel %vm256, %v200, 0
        %281 = vmatprep.subr.mxu0 0.0
        %282 = vmatpush1.msra.mxu0 0.0
        %283 = vmatprep.subr.mxu0 0.0
        %284 = vmatpush1.msra.mxu0 0.0
        %285 = vmatprep.subr.mxu0 0.0
        %286 = vmatpush1.msra.mxu0 0.0
        %287 = vmatprep.subr.mxu0 0.0
        %288 = vmatpush1.msra.mxu0 0.0
        %289 = vmatprep.subr.mxu0 0.0
        %290 = vmatpush1.msra.mxu0 0.0
        %291 = vmatprep.subr.mxu0 0.0
        %292 = vmatpush1.msra.mxu0 0.0
        %293 = vmatprep.subr.mxu0 0.0
        %294 = vmatpush1.msra.mxu0 0.0
        %295 = vmatprep.subr.mxu0 0.0
        %296 = vmatpush1.msra.mxu0 0.0
        %297 = vmatprep.subr.mxu0 0.0
        %298 = vmatpush1.msra.mxu0 0.0
        %299 = vmatprep.subr.mxu0 0.0
        %300 = vmatpush1.msra.mxu0 %v207
        %301 = vmatprep.subr.mxu0 0.0
        %302 = vmatpush1.msra.mxu0 %v206
        %303 = vmatprep.subr.mxu0 0.0
        %304 = vmatpush1.msra.mxu0 %v205
        %305 = vmatprep.subr.mxu0 0.0
        %306 = vmatpush1.msra.mxu0 %v204
        %307 = vmatprep.subr.mxu0 0.0
        %308 = vmatpush1.msra.mxu0 %v203
        %309 = vmatprep.subr.mxu0 0.0
        %310 = vmatpush1.msra.mxu0 %v202
        %311 = vmatprep.subr.mxu0 0.0
        %312 = vmatpush1.msra.mxu0 %v201
        %313 = vmatprep.subr.mxu0 0.0
        %314 = vmatpush2.msra.mxu0 0.0
        %315 = vmatprep.subr.mxu0 0.0
        %316 = vmatpush2.msra.mxu0 0.0
        %317 = vmatprep.subr.mxu0 0.0
        %318 = vmatpush2.msra.mxu0 0.0
        %319 = vmatprep.subr.mxu0 0.0
        %320 = vmatpush2.msra.mxu0 0.0
        %321 = vmatprep.subr.mxu0 0.0
        %322 = vmatpush2.msra.mxu0 0.0
        %323 = vmatprep.subr.mxu0 0.0
        %324 = vmatpush2.msra.mxu0 0.0
        %325 = vmatprep.subr.mxu0 0.0
        %326 = vmatpush2.msra.mxu0 0.0
        %327 = vmatprep.subr.mxu0 0.0
        %328 = vmatpush2.msra.mxu0 0.0
        %329 = vmatprep.subr.mxu0 0.0
        %330 = vmatpush2.msra.mxu0 0.0
        %331 = vmatprep.subr.mxu0 0.0
        %332 = vmatpush2.msra.mxu0 0.0
        %333 = vmatprep.subr.mxu0 0.0
        %334 = vmatpush2.msra.mxu0 0.0
        %335 = vmatprep.subr.mxu0 0.0
        %336 = vmatpush2.msra.mxu0 0.0
        %337 = vmatprep.subr.mxu0 0.0
        %338 = vmatpush2.msra.mxu0 0.0
        %339 = vmatprep.subr.mxu0 0.0
        %340 = vmatpush2.msra.mxu0 0.0
        %341 = vmatprep.subr.mxu0 0.0
        %342 = vmatpush2.msra.mxu0 0.0
        %343 = vmatprep.subr.mxu0 0.0
        %344 = vmatpush2.msra.mxu0 0.0
        %345 = vmatprep.mubr.f32.mxu0 0.0
        %346 = vmatmul.mubr.f32.gmra.mxu0 %v258
        %v347 = vpop.f32.mrf.mxu0
        %v348 = vadd.f32 %v219, %v347
        %v349 = vpop.f32.mrf.mxu0
        %350 = vmatprep.mubr.f32.mxu0 0.0
        %351 = vmatmul.mubr.f32.gmra.mxu0 %v261
        %v352 = vpop.f32.mrf.mxu0
        %v353 = vadd.f32 %v224, %v352
        %v354 = vpop.f32.mrf.mxu0
        %355 = vmatprep.mubr.f32.mxu0 0.0
        %356 = vmatmul.mubr.f32.gmra.mxu0 %v264
        %v357 = vpop.f32.mrf.mxu0
        %v358 = vadd.f32 %v229, %v357
        %v359 = vpop.f32.mrf.mxu0
        %360 = vmatprep.mubr.f32.mxu0 0.0
        %361 = vmatmul.mubr.f32.gmra.mxu0 %v267
        %v362 = vpop.f32.mrf.mxu0
        %v363 = vadd.f32 %v234, %v362
        %v364 = vpop.f32.mrf.mxu0
        %365 = vmatprep.mubr.f32.mxu0 0.0
        %366 = vmatmul.mubr.f32.gmra.mxu0 %v270
        %v367 = vpop.f32.mrf.mxu0
        %v368 = vadd.f32 %v239, %v367
        %v369 = vpop.f32.mrf.mxu0
        %370 = vmatprep.mubr.f32.mxu0 0.0
        %371 = vmatmul.mubr.f32.gmra.mxu0 %v273
        %v372 = vpop.f32.mrf.mxu0
        %v373 = vadd.f32 %v244, %v372
        %v374 = vpop.f32.mrf.mxu0
        %375 = vmatprep.mubr.f32.mxu0 0.0
        %376 = vmatmul.mubr.f32.gmra.mxu0 %v276
        %v377 = vpop.f32.mrf.mxu0
        %v378 = vadd.f32 %v249, %v377
        %v379 = vpop.f32.mrf.mxu0
        %380 = vmatprep.mubr.f32.mxu0 0.0
        %381 = vmatmul.mubr.f32.gmra.mxu0 %v279
        %v382 = vpop.f32.mrf.mxu0
        %v383 = vadd.f32 %v254, %v382
        %v384 = vpop.f32.mrf.mxu0
        %385 = vdwg.mxu0
        %v386 = vmax.f32 %v348, 0.0
        %v387 = vmax.f32 %v353, 0.0
        %v388 = vmax.f32 %v358, 0.0
        %v389 = vmax.f32 %v363, 0.0
        %v390 = vld [vmem:[#allocation2] sm:$0xff]
        %v391 = vld [vmem:[#allocation2 + $0x8] sm:$0xff]
        %v392 = vld [vmem:[#allocation2 + $0x10] sm:$0xff]
        %v393 = vld [vmem:[#allocation2 + $0x18] sm:$0xff]
        %v394 = vadd.f32 %v386, %v368
        %v395 = vadd.f32 %v387, %v373
        %v396 = vadd.f32 %v388, %v378
        %v397 = vadd.f32 %v389, %v383
        %v398 = vmax.f32 %v394, 0.0
        %v399 = vmax.f32 %v395, 0.0
        %v400 = vmax.f32 %v396, 0.0
        %v401 = vmax.f32 %v397, 0.0
        %v402 = vadd.f32 %v390, %v398
        %v403 = vadd.f32 %v391, %v399
        %v404 = vadd.f32 %v392, %v400
        %v405 = vadd.f32 %v393, %v401
        %406 = vst [vmem:[#allocation2] sm:$0xff] %v402
        %407 = vst [vmem:[#allocation2 + $0x8] sm:$0xff] %v403
        %408 = vst [vmem:[#allocation2 + $0x10] sm:$0xff] %v404
        %409 = vst [vmem:[#allocation2 + $0x18] sm:$0xff] %v405
        // Predicated region
        $region37: #{tpu_custom_call.1} parent=31 // pred_check
          %p410 = pneg %p115
        $region38: #{tpu_custom_call.1} parent=31 // pred_check_branch
          %412 = sbr.rel (%p410) target = $region40
        $region39: #{tpu_custom_call.1} parent=31 // pred_region
          %s414 = ssub.s32 512, 512
          %415 = vsyncadd [#allocation3], %s414
          %s416 = smul.addr %s19, 128
          %s417 = scalar_lea.hbm %s3, %s416
          %s418 = sshll.u32 [#allocation2], 4
          %s419 = int_to_ptr.vmem [resolvable:$true] %s418
          %424 = dma.vmem_to_hbm [thread:$0]  %s419, 512, %s417, [#allocation3], 128, 128, 8
        $region40: #{tpu_custom_call.1} parent=31 // pred_fallthru
          _
        // Predicated region
        $region41: #{tpu_custom_call.1} parent=31 // pred_check
          %p425 = pneg %p115
        $region42: #{tpu_custom_call.1} parent=31 // pred_check_branch
          %427 = sbr.rel (%p425) target = $region44
        $region43: #{tpu_custom_call.1} parent=31 // pred_region
          %428 = dma.done [#allocation3], 512
        $region44: #{tpu_custom_call.1} parent=31 // pred_fallthru
          _
      $region32: #{tpu_custom_call.1} parent=5 // pred_fallthru
        _
      %p429 = scmp.le.s32.totalorder 2, %s10
      // Predicated region
      $region45: #{tpu_custom_call.1} parent=5 // pred_check
        %p430 = pneg %p429
      $region46: #{tpu_custom_call.1} parent=5 // pred_check_branch
        %432 = sbr.rel (%p430) target = $region48
      $region47: #{tpu_custom_call.1} parent=5 // pred_region
        %s433 = ssub.s32 %s10, 2
      $region48: #{tpu_custom_call.1} parent=5 // pred_fallthru
        _
    $region6: #{tpu_custom_call.1} parent=1 // loop_footer
      %s14 = sadd.s32 1, %s10
    $region7: #{tpu_custom_call.1} parent=1 // loop_footer_branch
      %9 = sbr.rel target = $region3
    $region8: #{tpu_custom_call.1} parent=1 // loop_exit
      _
    %434 = vsyncpa [#allocation3], 1
    %s435 = scalar_lea.sflag [#allocation3], 1
    %436 = vsyncpa %s435, 1

</llo_original>
